<compile_context>
chip_gen: v6e
topology: v6e:2x2x1
jax: 0.10.0
libtpu: 0.0.40
codegen_flags: <defaults>
</compile_context>

<pallas_src>
import jax
import jax.numpy as jnp
import numpy as np
from jax.experimental import pallas as pl

BN_EPS = 1e-5


def _tatt_fused_kernel(seq_ref, w1_ref, w2_ref, w_ref, b_ref, v_ref,
                       gamma_ref, beta_ref, o_ref):
    # seq_ref  (B, C, N, T)  native layout (no wrapper transpose)
    # w1_ref   (1, C, 1, 1)  conv1 weight (c_in  -> 1)
    # w2_ref   (1, 1, N, 1)  conv2 weight (nodes -> 1)
    # w_ref    (N, C);  b_ref / v_ref (T, T)
    # gamma_ref / beta_ref (1, T)   BN affine
    # o_ref    (B, T, T)     coefs[b, i, s]
    seq = seq_ref[...]
    B = seq.shape[0]
    T = b_ref.shape[0]

    # conv1: f1[b, n, t] = sum_c w1[c] * seq[b, c, n, t]   (leading-axis reduce, VPU)
    f1 = jnp.sum(w1_ref[...] * seq, axis=1)                      # (B, N, T)
    # conv2: f2[b, c, t] = sum_n w2[n] * seq[b, c, n, t]   (sublane reduce, XLU)
    f2 = jnp.sum(w2_ref[...] * seq, axis=2)                      # (B, C, T)

    w = w_ref[...]
    bias = b_ref[...]
    v = v_ref[...]

    # Per-batch (T, T) attention maps.  Batch stays on the leading axis, so all
    # slicing below is a free view (no lane shuffles); B is tiny and static.
    xs = []
    for bi in range(B):
        # m1^T = w^T @ f1_b : (N, C) x (N, T) contracted over N -> (C, T)
        m1t = jax.lax.dot_general(
            w, f1[bi], dimension_numbers=(((0,), (0,)), ((), ())),
            preferred_element_type=jnp.float32)
        # pre = m1_b @ f2_b : contract over C -> (T, T)   pre[t, s]
        pre = jax.lax.dot_general(
            m1t, f2[bi], dimension_numbers=(((0,), (0,)), ((), ())),
            preferred_element_type=jnp.float32)
        s = jax.nn.sigmoid(pre + bias)
        # x_b = v @ sigmoid(...)  -> (T, T)
        xs.append(jnp.dot(v, s, preferred_element_type=jnp.float32))

    # BatchNorm1d, training-mode batch statistics; channel = temporal axis s,
    # stats over (batch, rows).  Two-pass mean/variance (matches reference).
    count = float(B * T)
    s1 = xs[0].sum(axis=0, keepdims=True)
    for bi in range(1, B):
        s1 = s1 + xs[bi].sum(axis=0, keepdims=True)
    mean = s1 * (1.0 / count)                                    # (1, T)
    s2 = None
    for bi in range(B):
        d = xs[bi] - mean
        t2 = jnp.sum(d * d, axis=0, keepdims=True)
        s2 = t2 if s2 is None else s2 + t2
    var = s2 * (1.0 / count)                                     # (1, T)
    scale = jax.lax.rsqrt(var + BN_EPS) * gamma_ref[...]         # (1, T)
    shift = beta_ref[...] - mean * scale                         # (1, T)

    # Normalize + softmax over the temporal axis; store (B, T, T) directly so
    # the wrapper needs no un-permute.
    for bi in range(B):
        y = xs[bi] * scale + shift
        y = y - jnp.max(y, axis=-1, keepdims=True)
        e = jnp.exp(y)
        # exact normalizer (approx reciprocal previously broke row-sum == 1)
        o_ref[bi] = e / jnp.sum(e, axis=-1, keepdims=True)


@jax.jit
def tatt_1_r_forward(seq, w1, w2, w, bparam, v, gamma, beta):
    """seq: (B, c_in, num_nodes, tem_size) float32. Returns (B, T, T) coefs."""
    B, C, N, T = seq.shape
    return pl.pallas_call(
        _tatt_fused_kernel,
        out_shape=jax.ShapeDtypeStruct((B, T, T), jnp.float32),
    )(seq,
      w1.reshape(1, C, 1, 1), w2.reshape(1, 1, N, 1), w, bparam, v,
      gamma.reshape(1, T), beta.reshape(1, T))


def reference_forward(seq, w1, w2, w, bparam, v, gamma, beta):
    hp = jax.lax.Precision.HIGHEST
    f1 = jnp.einsum('bcnt,c->btn', seq, w1, precision=hp)         # (B, T, N)
    f2 = jnp.einsum('bcnt,n->bct', seq, w2, precision=hp)         # (B, C, T)
    m1 = jnp.einsum('btn,nc->btc', f1, w, precision=hp)           # (B, T, C)
    logits = jax.nn.sigmoid(
        jnp.einsum('btc,bcs->bts', m1, f2, precision=hp) + bparam)
    x = jnp.einsum('ij,bjs->bis', v, logits, precision=hp)        # (B, T, T)
    # BatchNorm1d (training-mode, biased variance); channel axis = last axis
    mean = jnp.mean(x, axis=(0, 1), keepdims=True)
    var = jnp.mean((x - mean) ** 2, axis=(0, 1), keepdims=True)
    y = ((x - mean) / jnp.sqrt(var + BN_EPS)
         * gamma.reshape(1, 1, -1) + beta.reshape(1, 1, -1))
    return jax.nn.softmax(y, axis=-1)


if __name__ == "__main__":
    B, C, N, T = 2, 4, 16, 16   # batch, c_in, num_nodes, tem_size
    key = jax.random.PRNGKey(0)
    k0, k1, k2, k3, k4 = jax.random.split(key, 5)

    seq = jax.random.normal(k0, (B, C, N, T), dtype=jnp.float32)

    # deterministic parameter init (shapes from the module's __init__)
    w1 = jax.random.uniform(k1, (C,), jnp.float32, -0.5, 0.5)      # conv1 weight (1,C,1,1)
    w2 = jax.random.uniform(k2, (N,), jnp.float32, -0.25, 0.25)    # conv2 weight (1,N,1,1)
    xw = float(np.sqrt(6.0 / (N + C)))
    w = jax.random.uniform(k3, (N, C), jnp.float32, -xw, xw)       # xavier-uniform
    bparam = jnp.zeros((T, T), jnp.float32)
    xv = float(np.sqrt(6.0 / (T + T)))
    v = jax.random.uniform(k4, (T, T), jnp.float32, -xv, xv)       # xavier-uniform
    gamma = jnp.ones((T,), jnp.float32)                            # BN weight
    beta = jnp.zeros((T,), jnp.float32)                            # BN bias

    coefs = tatt_1_r_forward(seq, w1, w2, w, bparam, v, gamma, beta)
    coefs = jax.block_until_ready(coefs)

    ref = reference_forward(seq, w1, w2, w, bparam, v, gamma, beta)
    np.testing.assert_allclose(np.asarray(coefs), np.asarray(ref),
                               atol=2e-2, rtol=0)
    assert np.allclose(np.asarray(coefs).sum(-1), 1.0, atol=1e-3)
    print("KERNEL_OK")
</pallas_src>

<mosaic_0001>
module attributes {stable_mosaic.version = 11 : i64} {
  func.func @_tatt_fused_kernel(%arg0: memref<2x4x16x16xf32, #tpu.memory_space<vmem>>, %arg1: memref<1x4x1x1xf32, #tpu.memory_space<vmem>>, %arg2: memref<1x1x16x1xf32, #tpu.memory_space<vmem>>, %arg3: memref<16x4xf32, #tpu.memory_space<vmem>>, %arg4: memref<16x16xf32, #tpu.memory_space<vmem>>, %arg5: memref<16x16xf32, #tpu.memory_space<vmem>>, %arg6: memref<1x16xf32, #tpu.memory_space<vmem>>, %arg7: memref<1x16xf32, #tpu.memory_space<vmem>>, %arg8: memref<2x16x16xf32, #tpu.memory_space<vmem>>) attributes {dimension_semantics = [], scalar_prefetch = 0 : i64, scratch_operands = 0 : i64, tpu.core_type = #tpu.core_type<tc>} {
    %c0 = arith.constant 0 : index
    %c0_0 = arith.constant 0 : index
    %c0_1 = arith.constant 0 : index
    %c0_2 = arith.constant 0 : index
    %0 = vector.load %arg0[%c0, %c0_0, %c0_1, %c0_2] : memref<2x4x16x16xf32, #tpu.memory_space<vmem>>, vector<2x4x16x16xf32>
    %c0_3 = arith.constant 0 : index
    %c0_4 = arith.constant 0 : index
    %c0_5 = arith.constant 0 : index
    %c0_6 = arith.constant 0 : index
    %1 = vector.load %arg1[%c0_3, %c0_4, %c0_5, %c0_6] : memref<1x4x1x1xf32, #tpu.memory_space<vmem>>, vector<1x4x1x1xf32>
    %2 = vector.broadcast %1 : vector<1x4x1x1xf32> to vector<2x4x16x16xf32>
    %3 = arith.mulf %2, %0 : vector<2x4x16x16xf32>
    %cst = arith.constant dense<0.000000e+00> : vector<2x16x16xf32>
    %4 = vector.multi_reduction <add>, %3, %cst [1] : vector<2x4x16x16xf32> to vector<2x16x16xf32>
    %c0_7 = arith.constant 0 : index
    %c0_8 = arith.constant 0 : index
    %c0_9 = arith.constant 0 : index
    %c0_10 = arith.constant 0 : index
    %5 = vector.load %arg2[%c0_7, %c0_8, %c0_9, %c0_10] : memref<1x1x16x1xf32, #tpu.memory_space<vmem>>, vector<1x1x16x1xf32>
    %6 = vector.broadcast %5 : vector<1x1x16x1xf32> to vector<2x4x16x16xf32>
    %7 = arith.mulf %6, %0 : vector<2x4x16x16xf32>
    %cst_11 = arith.constant dense<0.000000e+00> : vector<2x4x16xf32>
    %8 = vector.multi_reduction <add>, %7, %cst_11 [2] : vector<2x4x16x16xf32> to vector<2x4x16xf32>
    %c0_12 = arith.constant 0 : index
    %c0_13 = arith.constant 0 : index
    %9 = vector.load %arg3[%c0_12, %c0_13] : memref<16x4xf32, #tpu.memory_space<vmem>>, vector<16x4xf32>
    %c0_14 = arith.constant 0 : index
    %c0_15 = arith.constant 0 : index
    %10 = vector.load %arg4[%c0_14, %c0_15] : memref<16x16xf32, #tpu.memory_space<vmem>>, vector<16x16xf32>
    %c0_16 = arith.constant 0 : index
    %c0_17 = arith.constant 0 : index
    %11 = vector.load %arg5[%c0_16, %c0_17] : memref<16x16xf32, #tpu.memory_space<vmem>>, vector<16x16xf32>
    %12 = vector.extract_strided_slice %4 {offsets = [0, 0, 0], sizes = [1, 16, 16], strides = [1, 1, 1]} : vector<2x16x16xf32> to vector<1x16x16xf32>
    %13 = vector.shape_cast %12 : vector<1x16x16xf32> to vector<16x16xf32>
    %cst_18 = arith.constant dense<0.000000e+00> : vector<4x16xf32>
    %14 = tpu.matmul %9, %13, %cst_18 {dimension_numbers = #tpu.dot_dimension_numbers<[0], [0], [1], [1], [0, 1, 1, 1], [], []>} : vector<16x4xf32>, vector<16x16xf32>, vector<4x16xf32> -> vector<4x16xf32>
    %15 = vector.extract_strided_slice %8 {offsets = [0, 0, 0], sizes = [1, 4, 16], strides = [1, 1, 1]} : vector<2x4x16xf32> to vector<1x4x16xf32>
    %16 = vector.shape_cast %15 : vector<1x4x16xf32> to vector<4x16xf32>
    %cst_19 = arith.constant dense<0.000000e+00> : vector<16x16xf32>
    %17 = tpu.matmul %14, %16, %cst_19 {dimension_numbers = #tpu.dot_dimension_numbers<[0], [0], [1], [1], [0, 1, 1, 1], [], []>} : vector<4x16xf32>, vector<4x16xf32>, vector<16x16xf32> -> vector<16x16xf32>
    %18 = arith.addf %17, %10 : vector<16x16xf32>
    %19 = arith.negf %18 : vector<16x16xf32>
    %20 = math.exp %19 : vector<16x16xf32>
    %cst_20 = arith.constant 1.000000e+00 : f32
    %21 = vector.broadcast %cst_20 : f32 to vector<16x16xf32>
    %22 = arith.addf %21, %20 : vector<16x16xf32>
    %23 = arith.divf %21, %22 : vector<16x16xf32>
    %cst_21 = arith.constant dense<0.000000e+00> : vector<16x16xf32>
    %24 = tpu.matmul %11, %23, %cst_21 {dimension_numbers = #tpu.dot_dimension_numbers<[1], [0], [0], [1], [0, 0, 1, 1], [], []>} : vector<16x16xf32>, vector<16x16xf32>, vector<16x16xf32> -> vector<16x16xf32>
    %25 = vector.extract_strided_slice %4 {offsets = [1, 0, 0], sizes = [1, 16, 16], strides = [1, 1, 1]} : vector<2x16x16xf32> to vector<1x16x16xf32>
    %26 = vector.shape_cast %25 : vector<1x16x16xf32> to vector<16x16xf32>
    %cst_22 = arith.constant dense<0.000000e+00> : vector<4x16xf32>
    %27 = tpu.matmul %9, %26, %cst_22 {dimension_numbers = #tpu.dot_dimension_numbers<[0], [0], [1], [1], [0, 1, 1, 1], [], []>} : vector<16x4xf32>, vector<16x16xf32>, vector<4x16xf32> -> vector<4x16xf32>
    %28 = vector.extract_strided_slice %8 {offsets = [1, 0, 0], sizes = [1, 4, 16], strides = [1, 1, 1]} : vector<2x4x16xf32> to vector<1x4x16xf32>
    %29 = vector.shape_cast %28 : vector<1x4x16xf32> to vector<4x16xf32>
    %cst_23 = arith.constant dense<0.000000e+00> : vector<16x16xf32>
    %30 = tpu.matmul %27, %29, %cst_23 {dimension_numbers = #tpu.dot_dimension_numbers<[0], [0], [1], [1], [0, 1, 1, 1], [], []>} : vector<4x16xf32>, vector<4x16xf32>, vector<16x16xf32> -> vector<16x16xf32>
    %31 = arith.addf %30, %10 : vector<16x16xf32>
    %32 = arith.negf %31 : vector<16x16xf32>
    %33 = math.exp %32 : vector<16x16xf32>
    %cst_24 = arith.constant 1.000000e+00 : f32
    %34 = vector.broadcast %cst_24 : f32 to vector<16x16xf32>
    %35 = arith.addf %34, %33 : vector<16x16xf32>
    %36 = arith.divf %34, %35 : vector<16x16xf32>
    %cst_25 = arith.constant dense<0.000000e+00> : vector<16x16xf32>
    %37 = tpu.matmul %11, %36, %cst_25 {dimension_numbers = #tpu.dot_dimension_numbers<[1], [0], [0], [1], [0, 0, 1, 1], [], []>} : vector<16x16xf32>, vector<16x16xf32>, vector<16x16xf32> -> vector<16x16xf32>
    %cst_26 = arith.constant dense<0.000000e+00> : vector<16xf32>
    %38 = vector.multi_reduction <add>, %24, %cst_26 [0] : vector<16x16xf32> to vector<16xf32>
    %39 = vector.shape_cast %38 : vector<16xf32> to vector<1x16xf32>
    %cst_27 = arith.constant dense<0.000000e+00> : vector<16xf32>
    %40 = vector.multi_reduction <add>, %37, %cst_27 [0] : vector<16x16xf32> to vector<16xf32>
    %41 = vector.shape_cast %40 : vector<16xf32> to vector<1x16xf32>
    %42 = arith.addf %39, %41 : vector<1x16xf32>
    %cst_28 = arith.constant 3.125000e-02 : f32
    %43 = vector.broadcast %cst_28 : f32 to vector<1x16xf32>
    %44 = arith.mulf %42, %43 : vector<1x16xf32>
    %45 = vector.broadcast %44 : vector<1x16xf32> to vector<16x16xf32>
    %46 = arith.subf %24, %45 : vector<16x16xf32>
    %47 = arith.mulf %46, %46 : vector<16x16xf32>
    %cst_29 = arith.constant dense<0.000000e+00> : vector<16xf32>
    %48 = vector.multi_reduction <add>, %47, %cst_29 [0] : vector<16x16xf32> to vector<16xf32>
    %49 = vector.shape_cast %48 : vector<16xf32> to vector<1x16xf32>
    %50 = vector.broadcast %44 : vector<1x16xf32> to vector<16x16xf32>
    %51 = arith.subf %37, %50 : vector<16x16xf32>
    %52 = arith.mulf %51, %51 : vector<16x16xf32>
    %cst_30 = arith.constant dense<0.000000e+00> : vector<16xf32>
    %53 = vector.multi_reduction <add>, %52, %cst_30 [0] : vector<16x16xf32> to vector<16xf32>
    %54 = vector.shape_cast %53 : vector<16xf32> to vector<1x16xf32>
    %55 = arith.addf %49, %54 : vector<1x16xf32>
    %cst_31 = arith.constant 3.125000e-02 : f32
    %56 = vector.broadcast %cst_31 : f32 to vector<1x16xf32>
    %57 = arith.mulf %55, %56 : vector<1x16xf32>
    %cst_32 = arith.constant 9.99999974E-6 : f32
    %58 = vector.broadcast %cst_32 : f32 to vector<1x16xf32>
    %59 = arith.addf %57, %58 : vector<1x16xf32>
    %60 = math.rsqrt %59 : vector<1x16xf32>
    %c0_33 = arith.constant 0 : index
    %c0_34 = arith.constant 0 : index
    %61 = vector.load %arg6[%c0_33, %c0_34] : memref<1x16xf32, #tpu.memory_space<vmem>>, vector<1x16xf32>
    %62 = arith.mulf %60, %61 : vector<1x16xf32>
    %c0_35 = arith.constant 0 : index
    %c0_36 = arith.constant 0 : index
    %63 = vector.load %arg7[%c0_35, %c0_36] : memref<1x16xf32, #tpu.memory_space<vmem>>, vector<1x16xf32>
    %64 = arith.mulf %44, %62 : vector<1x16xf32>
    %65 = arith.subf %63, %64 : vector<1x16xf32>
    %66 = vector.broadcast %62 : vector<1x16xf32> to vector<16x16xf32>
    %67 = arith.mulf %24, %66 : vector<16x16xf32>
    %68 = vector.broadcast %65 : vector<1x16xf32> to vector<16x16xf32>
    %69 = arith.addf %67, %68 : vector<16x16xf32>
    %cst_37 = arith.constant dense<0xFF800000> : vector<16xf32>
    %70 = vector.multi_reduction <maximumf>, %69, %cst_37 [1] : vector<16x16xf32> to vector<16xf32>
    %71 = vector.shape_cast %70 : vector<16xf32> to vector<16x1xf32>
    %72 = vector.broadcast %71 : vector<16x1xf32> to vector<16x16xf32>
    %73 = arith.subf %69, %72 : vector<16x16xf32>
    %74 = math.exp %73 : vector<16x16xf32>
    %cst_38 = arith.constant dense<0.000000e+00> : vector<16xf32>
    %75 = vector.multi_reduction <add>, %74, %cst_38 [1] : vector<16x16xf32> to vector<16xf32>
    %76 = vector.shape_cast %75 : vector<16xf32> to vector<16x1xf32>
    %77 = vector.broadcast %76 : vector<16x1xf32> to vector<16x16xf32>
    %78 = arith.divf %74, %77 : vector<16x16xf32>
    %c0_39 = arith.constant 0 : index
    %c0_40 = arith.constant 0 : index
    %c0_41 = arith.constant 0 : index
    %79 = vector.load %arg8[%c0_39, %c0_40, %c0_41] : memref<2x16x16xf32, #tpu.memory_space<vmem>>, vector<1x16x16xf32>
    %80 = vector.shape_cast %79 : vector<1x16x16xf32> to vector<16x16xf32>
    %81 = vector.shape_cast %78 : vector<16x16xf32> to vector<1x16x16xf32>
    tpu.vector_store %arg8[%c0_39, %c0_40, %c0_41], %81 {strides = array<i32>} : memref<2x16x16xf32, #tpu.memory_space<vmem>>, vector<1x16x16xf32>,
    %82 = vector.broadcast %62 : vector<1x16xf32> to vector<16x16xf32>
    %83 = arith.mulf %37, %82 : vector<16x16xf32>
    %84 = vector.broadcast %65 : vector<1x16xf32> to vector<16x16xf32>
    %85 = arith.addf %83, %84 : vector<16x16xf32>
    %cst_42 = arith.constant dense<0xFF800000> : vector<16xf32>
    %86 = vector.multi_reduction <maximumf>, %85, %cst_42 [1] : vector<16x16xf32> to vector<16xf32>
    %87 = vector.shape_cast %86 : vector<16xf32> to vector<16x1xf32>
    %88 = vector.broadcast %87 : vector<16x1xf32> to vector<16x16xf32>
    %89 = arith.subf %85, %88 : vector<16x16xf32>
    %90 = math.exp %89 : vector<16x16xf32>
    %cst_43 = arith.constant dense<0.000000e+00> : vector<16xf32>
    %91 = vector.multi_reduction <add>, %90, %cst_43 [1] : vector<16x16xf32> to vector<16xf32>
    %92 = vector.shape_cast %91 : vector<16xf32> to vector<16x1xf32>
    %93 = vector.broadcast %92 : vector<16x1xf32> to vector<16x16xf32>
    %94 = arith.divf %90, %93 : vector<16x16xf32>
    %c1 = arith.constant 1 : index
    %c0_44 = arith.constant 0 : index
    %c0_45 = arith.constant 0 : index
    %95 = vector.load %arg8[%c1, %c0_44, %c0_45] : memref<2x16x16xf32, #tpu.memory_space<vmem>>, vector<1x16x16xf32>
    %96 = vector.shape_cast %95 : vector<1x16x16xf32> to vector<16x16xf32>
    %97 = vector.shape_cast %94 : vector<16x16xf32> to vector<1x16x16xf32>
    tpu.vector_store %arg8[%c1, %c0_44, %c0_45], %97 {strides = array<i32>} : memref<2x16x16xf32, #tpu.memory_space<vmem>>, vector<1x16x16xf32>,
    return
  }
}

</mosaic_0001>

<llo_original>
// kernel: tatt_1_r_forward.1
$region0: #{tatt_1_r_forward.1}
  #allocation0 [shape = 'u32[]', space=smem, size = 0x4, offset = 0x4, fixed_abs, tag = 'smem constant byte address 0x4 - core index']
  #allocation1 [shape = 'u32[144,128]{1,0:T(1,128)}', space=vmem, size = 0x12000, scoped, tag = 'internal scratch']
  %s0 = inlined_call_operand.hbm [shape: f32[2,4,16,16], index: 0, kind: input, shape index: {}]
  %s1 = inlined_call_operand.vmem [shape: f32[1,4,1,1], index: 1, kind: input, shape index: {}]
  %s2 = inlined_call_operand.vmem [shape: f32[1,1,16,1], index: 2, kind: input, shape index: {}]
  %s3 = inlined_call_operand.vmem [shape: f32[16,4], index: 3, kind: input, shape index: {}]
  %s4 = inlined_call_operand.vmem [shape: f32[16,16], index: 4, kind: input, shape index: {}]
  %s5 = inlined_call_operand.vmem [shape: f32[16,16], index: 5, kind: input, shape index: {}]
  %s6 = inlined_call_operand.vmem [shape: f32[1,16], index: 6, kind: input, shape index: {}]
  %s7 = inlined_call_operand.vmem [shape: f32[1,16], index: 7, kind: input, shape index: {}]
  %s8 = inlined_call_operand.hbm [shape: f32[2,16,16], index: 8, kind: output, shape index: {}]
  %s9 = sld [smem:[#allocation0]]
  $region46: #{tatt_1_r_forward.1} parent=0
    _
  %s11 = ssub.s32 1, %s9
  %s12 = scalar_select 0, %s11, %s9
  $region1: #{tatt_1_r_forward.1} parent=0
    #allocation2 [shape = 'u8[65536]{0}', space=vmem, size = 0x10000, scoped, tag = 'input window, operand 0, single buffered']
    #allocation3 [shape = 's32[1]{0}', space=sflag, size = 0x4, scoped, tag = 'scoped memory for tatt_1_r_forward.1']
    #allocation4 [shape = 's32[1]{0}', space=sflag, size = 0x4, scoped, tag = 'scoped memory for tatt_1_r_forward.1']
    #allocation5 [shape = 'u8[16384]{0}', space=vmem, size = 0x4000, scoped, tag = 'output window, operand 0, single buffered']
    %13 = vsyncpa [#allocation3], 0
    %14 = vsyncpa [#allocation4], 0
    // Predicated region
    $region2: #{tatt_1_r_forward.1} parent=1 // pred_check
      _
    $region3: #{tatt_1_r_forward.1} parent=1 // pred_check_branch
      %16 = sbr.rel (0) target = $region5
    $region4: #{tatt_1_r_forward.1} parent=1 // pred_region
      %s18 = ssub.s32 2048, 2048
      %19 = vsyncadd [#allocation3], %s18
      %s20 = sshll.u32 [#allocation2], 4
      %s21 = int_to_ptr.vmem [resolvable:$true] %s20
      %26 = dma.hbm_to_vmem [thread:$0]  %s0, 2048, %s21, [#allocation3], 128, 128, 8
    $region5: #{tatt_1_r_forward.1} parent=1 // pred_fallthru
      _
    // Predicated region
    $region6: #{tatt_1_r_forward.1} parent=1 // pred_check
      _
    $region7: #{tatt_1_r_forward.1} parent=1 // pred_check_branch
      %28 = sbr.rel (0) target = $region9
    $region8: #{tatt_1_r_forward.1} parent=1 // pred_region
      _
    $region9: #{tatt_1_r_forward.1} parent=1 // pred_fallthru
      _
    // Predicated region
    $region10: #{tatt_1_r_forward.1} parent=1 // pred_check
      _
    $region11: #{tatt_1_r_forward.1} parent=1 // pred_check_branch
      %30 = sbr.rel (0) target = $region13
    $region12: #{tatt_1_r_forward.1} parent=1 // pred_region
      _
    $region13: #{tatt_1_r_forward.1} parent=1 // pred_fallthru
      _
    // Predicated region
    $region14: #{tatt_1_r_forward.1} parent=1 // pred_check
      _
    $region15: #{tatt_1_r_forward.1} parent=1 // pred_check_branch
      %32 = sbr.rel (0) target = $region17
    $region16: #{tatt_1_r_forward.1} parent=1 // pred_region
      _
    $region17: #{tatt_1_r_forward.1} parent=1 // pred_fallthru
      _
    // Predicated region
    $region18: #{tatt_1_r_forward.1} parent=1 // pred_check
      _
    $region19: #{tatt_1_r_forward.1} parent=1 // pred_check_branch
      %34 = sbr.rel (0) target = $region21
    $region20: #{tatt_1_r_forward.1} parent=1 // pred_region
      _
    $region21: #{tatt_1_r_forward.1} parent=1 // pred_fallthru
      _
    // Predicated region
    $region22: #{tatt_1_r_forward.1} parent=1 // pred_check
      _
    $region23: #{tatt_1_r_forward.1} parent=1 // pred_check_branch
      %36 = sbr.rel (0) target = $region25
    $region24: #{tatt_1_r_forward.1} parent=1 // pred_region
      _
    $region25: #{tatt_1_r_forward.1} parent=1 // pred_fallthru
      _
    // Predicated region
    $region26: #{tatt_1_r_forward.1} parent=1 // pred_check
      _
    $region27: #{tatt_1_r_forward.1} parent=1 // pred_check_branch
      %38 = sbr.rel (0) target = $region29
    $region28: #{tatt_1_r_forward.1} parent=1 // pred_region
      _
    $region29: #{tatt_1_r_forward.1} parent=1 // pred_fallthru
      _
    // Predicated region
    $region30: #{tatt_1_r_forward.1} parent=1 // pred_check
      _
    $region31: #{tatt_1_r_forward.1} parent=1 // pred_check_branch
      %40 = sbr.rel (0) target = $region33
    $region32: #{tatt_1_r_forward.1} parent=1 // pred_region
      _
    $region33: #{tatt_1_r_forward.1} parent=1 // pred_fallthru
      _
    // Predicated region
    $region34: #{tatt_1_r_forward.1} parent=1 // pred_check
      _
    $region35: #{tatt_1_r_forward.1} parent=1 // pred_check_branch
      %42 = sbr.rel (0) target = $region37
    $region36: #{tatt_1_r_forward.1} parent=1 // pred_region
      %43 = dma.done [#allocation3], 2048
    $region37: #{tatt_1_r_forward.1} parent=1 // pred_fallthru
      _
    %v44 = vld [vmem:[#allocation2] sm:$0xff]
    %v45 = vld [vmem:[#allocation2 + $0x8] sm:$0xff]
    %v46 = vld [vmem:[#allocation2 + $0x10] sm:$0xff]
    %v47 = vld [vmem:[#allocation2 + $0x18] sm:$0xff]
    %v48 = vld [vmem:[#allocation2 + $0x20] sm:$0xff]
    %v49 = vld [vmem:[#allocation2 + $0x28] sm:$0xff]
    %v50 = vld [vmem:[#allocation2 + $0x30] sm:$0xff]
    %v51 = vld [vmem:[#allocation2 + $0x38] sm:$0xff]
    %v52 = vld [vmem:[#allocation2 + $0x40] sm:$0xff]
    %v53 = vld [vmem:[#allocation2 + $0x48] sm:$0xff]
    %v54 = vld [vmem:[#allocation2 + $0x50] sm:$0xff]
    %v55 = vld [vmem:[#allocation2 + $0x58] sm:$0xff]
    %v56 = vld [vmem:[#allocation2 + $0x60] sm:$0xff]
    %v57 = vld [vmem:[#allocation2 + $0x68] sm:$0xff]
    %v58 = vld [vmem:[#allocation2 + $0x70] sm:$0xff]
    %v59 = vld [vmem:[#allocation2 + $0x78] sm:$0xff]
    %v60 = vld [vmem:[%s1] sm:$0x1]
    %v61 = vld [vmem:[%s1 + $0x1] sm:$0x1]
    %v62 = vld [vmem:[%s1 + $0x2] sm:$0x1]
    %v63 = vld [vmem:[%s1 + $0x3] sm:$0x1]
    %v68 = vlaneseq
    %v69 = vshrl.u32 %v68, 7
    %v70 = vsub.s32 0, %v69
    %v71 = vrot.slane %v60, %v70
    %v72 = vlaneseq
    %v73 = vshrl.u32 %v72, 7
    %v74 = vsub.s32 0, %v73
    %v75 = vrot.slane %v61, %v74
    %v76 = vlaneseq
    %v77 = vshrl.u32 %v76, 7
    %v78 = vsub.s32 0, %v77
    %v79 = vrot.slane %v62, %v78
    %v80 = vlaneseq
    %v81 = vshrl.u32 %v80, 7
    %v82 = vsub.s32 0, %v81
    %v83 = vrot.slane %v63, %v82
    %84 = vset.pattern.permute.xlu0 0
    %85 = vperm.xlu0 %84, %v71
    %v86 = vpop.permute.xlu0 %85
    %88 = vset.pattern.permute.xlu0 0
    %89 = vperm.xlu0 %88, %v75
    %v90 = vpop.permute.xlu0 %89
    %92 = vset.pattern.permute.xlu0 0
    %93 = vperm.xlu0 %92, %v79
    %v94 = vpop.permute.xlu0 %93
    %96 = vset.pattern.permute.xlu0 0
    %97 = vperm.xlu0 %96, %v83
    %v98 = vpop.permute.xlu0 %97
    %v100 = vmul.f32 %v86, %v44
    %v101 = vmul.f32 %v86, %v45
    %v102 = vmul.f32 %v90, %v46
    %v103 = vmul.f32 %v90, %v47
    %v104 = vmul.f32 %v94, %v48
    %v105 = vmul.f32 %v94, %v49
    %v106 = vmul.f32 %v98, %v50
    %v107 = vmul.f32 %v98, %v51
    %v108 = vmul.f32 %v86, %v52
    %v109 = vmul.f32 %v86, %v53
    %v110 = vmul.f32 %v90, %v54
    %v111 = vmul.f32 %v90, %v55
    %v112 = vmul.f32 %v94, %v56
    %v113 = vmul.f32 %v94, %v57
    %v114 = vmul.f32 %v98, %v58
    %v115 = vmul.f32 %v98, %v59
    %vm116 = vcmask 130048
    %v117 = vsel %vm116, %v100, 0.0
    %v118 = vsel %vm116, %v102, 0.0
    %v119 = vadd.f32 %v117, %v118
    %v120 = vsel %vm116, %v104, 0.0
    %v121 = vadd.f32 %v119, %v120
    %v122 = vsel %vm116, %v106, 0.0
    %v123 = vadd.f32 %v121, %v122
    %v124 = vsel %vm116, %v101, 0.0
    %v125 = vsel %vm116, %v103, 0.0
    %v126 = vadd.f32 %v124, %v125
    %v127 = vsel %vm116, %v105, 0.0
    %v128 = vadd.f32 %v126, %v127
    %v129 = vsel %vm116, %v107, 0.0
    %v130 = vadd.f32 %v128, %v129
    %v131 = vsel %vm116, %v108, 0.0
    %v132 = vsel %vm116, %v110, 0.0
    %v133 = vadd.f32 %v131, %v132
    %v134 = vsel %vm116, %v112, 0.0
    %v135 = vadd.f32 %v133, %v134
    %v136 = vsel %vm116, %v114, 0.0
    %v137 = vadd.f32 %v135, %v136
    %v138 = vsel %vm116, %v109, 0.0
    %v139 = vsel %vm116, %v111, 0.0
    %v140 = vadd.f32 %v138, %v139
    %v141 = vsel %vm116, %v113, 0.0
    %v142 = vadd.f32 %v140, %v141
    %v143 = vsel %vm116, %v115, 0.0
    %v144 = vadd.f32 %v142, %v143
    %v145 = vld [vmem:[%s2] sm:$0xff]
    %v146 = vld [vmem:[%s2 + $0x8] sm:$0xff]
    %148 = vset.pattern.permute.xlu0 0
    %149 = vperm.xlu0 %148, %v145
    %v150 = vpop.permute.xlu0 %149
    %153 = vset.pattern.permute.xlu0 0
    %154 = vperm.xlu0 %153, %v146
    %v155 = vpop.permute.xlu0 %154
    %v157 = vmul.f32 %v150, %v44
    %v158 = vmul.f32 %v155, %v45
    %v159 = vmul.f32 %v150, %v46
    %v160 = vmul.f32 %v155, %v47
    %v161 = vmul.f32 %v150, %v48
    %v162 = vmul.f32 %v155, %v49
    %v163 = vmul.f32 %v150, %v50
    %v164 = vmul.f32 %v155, %v51
    %v165 = vmul.f32 %v150, %v52
    %v166 = vmul.f32 %v155, %v53
    %v167 = vmul.f32 %v150, %v54
    %v168 = vmul.f32 %v155, %v55
    %v169 = vmul.f32 %v150, %v56
    %v170 = vmul.f32 %v155, %v57
    %v171 = vmul.f32 %v150, %v58
    %v172 = vmul.f32 %v155, %v59
    %v173 = vsel %vm116, %v157, 0.0
    %v174 = vsel %vm116, %v158, 0.0
    %v175 = vadd.f32 %v173, %v174
    %v176 = vrot.slane %v175, 4
    %v177 = vadd.f32 %v175, %v176
    %v178 = vrot.slane %v177, 2
    %v179 = vadd.f32 %v177, %v178
    %v180 = vrot.slane %v179, 1
    %v181 = vadd.f32 %v179, %v180
    %v182 = vsel %vm116, %v159, 0.0
    %v183 = vsel %vm116, %v160, 0.0
    %v184 = vadd.f32 %v182, %v183
    %v185 = vrot.slane %v184, 4
    %v186 = vadd.f32 %v184, %v185
    %v187 = vrot.slane %v186, 2
    %v188 = vadd.f32 %v186, %v187
    %v189 = vrot.slane %v188, 1
    %v190 = vadd.f32 %v188, %v189
    %v191 = vsel %vm116, %v161, 0.0
    %v192 = vsel %vm116, %v162, 0.0
    %v193 = vadd.f32 %v191, %v192
    %v194 = vrot.slane %v193, 4
    %v195 = vadd.f32 %v193, %v194
    %v196 = vrot.slane %v195, 2
    %v197 = vadd.f32 %v195, %v196
    %v198 = vrot.slane %v197, 1
    %v199 = vadd.f32 %v197, %v198
    %v200 = vsel %vm116, %v163, 0.0
    %v201 = vsel %vm116, %v164, 0.0
    %v202 = vadd.f32 %v200, %v201
    %v203 = vrot.slane %v202, 4
    %v204 = vadd.f32 %v202, %v203
    %v205 = vrot.slane %v204, 2
    %v206 = vadd.f32 %v204, %v205
    %v207 = vrot.slane %v206, 1
    %v208 = vadd.f32 %v206, %v207
    %v209 = vsel %vm116, %v165, 0.0
    %v210 = vsel %vm116, %v166, 0.0
    %v211 = vadd.f32 %v209, %v210
    %v212 = vrot.slane %v211, 4
    %v213 = vadd.f32 %v211, %v212
    %v214 = vrot.slane %v213, 2
    %v215 = vadd.f32 %v213, %v214
    %v216 = vrot.slane %v215, 1
    %v217 = vadd.f32 %v215, %v216
    %v218 = vsel %vm116, %v167, 0.0
    %v219 = vsel %vm116, %v168, 0.0
    %v220 = vadd.f32 %v218, %v219
    %v221 = vrot.slane %v220, 4
    %v222 = vadd.f32 %v220, %v221
    %v223 = vrot.slane %v222, 2
    %v224 = vadd.f32 %v222, %v223
    %v225 = vrot.slane %v224, 1
    %v226 = vadd.f32 %v224, %v225
    %v227 = vsel %vm116, %v169, 0.0
    %v228 = vsel %vm116, %v170, 0.0
    %v229 = vadd.f32 %v227, %v228
    %v230 = vrot.slane %v229, 4
    %v231 = vadd.f32 %v229, %v230
    %v232 = vrot.slane %v231, 2
    %v233 = vadd.f32 %v231, %v232
    %v234 = vrot.slane %v233, 1
    %v235 = vadd.f32 %v233, %v234
    %v236 = vsel %vm116, %v171, 0.0
    %v237 = vsel %vm116, %v172, 0.0
    %v238 = vadd.f32 %v236, %v237
    %v239 = vrot.slane %v238, 4
    %v240 = vadd.f32 %v238, %v239
    %v241 = vrot.slane %v240, 2
    %v242 = vadd.f32 %v240, %v241
    %v243 = vrot.slane %v242, 1
    %v244 = vadd.f32 %v242, %v243
    %v245 = vld [vmem:[%s3] sm:$0xff]
    %v246 = vld [vmem:[%s3 + $0x8] sm:$0xff]
    %v247 = vld [vmem:[%s4] sm:$0xff]
    %v248 = vld [vmem:[%s4 + $0x8] sm:$0xff]
    %v249 = vld [vmem:[%s5] sm:$0xff]
    %v250 = vld [vmem:[%s5 + $0x8] sm:$0xff]
    %251 = vxpose.xlu0.b32.start [1/16] %v245, 128
    %252 = vxpose.xlu0.b32.cont [2/16] %v246, 128
    %253 = vxpose.xlu0.b32.cont [3/16] 0.0, 128
    %254 = vxpose.xlu0.b32.cont [4/16] 0.0, 128
    %255 = vxpose.xlu0.b32.cont [5/16] 0.0, 128
    %256 = vxpose.xlu0.b32.cont [6/16] 0.0, 128
    %257 = vxpose.xlu0.b32.cont [7/16] 0.0, 128
    %258 = vxpose.xlu0.b32.cont [8/16] 0.0, 128
    %259 = vxpose.xlu0.b32.cont [9/16] 0.0, 128
    %260 = vxpose.xlu0.b32.cont [10/16] 0.0, 128
    %261 = vxpose.xlu0.b32.cont [11/16] 0.0, 128
    %262 = vxpose.xlu0.b32.cont [12/16] 0.0, 128
    %263 = vxpose.xlu0.b32.cont [13/16] 0.0, 128
    %264 = vxpose.xlu0.b32.cont [14/16] 0.0, 128
    %265 = vxpose.xlu0.b32.cont [15/16] 0.0, 128
    %266 = vxpose.xlu0.b32.end [16/16] 0.0, 128
    %v267 = vpop.trf.xlu0
    %v268 = vpop.trf.xlu0
    %v269 = vpop.trf.xlu0
    %v270 = vpop.trf.xlu0
    %v271 = vpop.trf.xlu0
    %v272 = vpop.trf.xlu0
    %v273 = vpop.trf.xlu0
    %v274 = vpop.trf.xlu0
    %v275 = vpop.trf.xlu0
    %v276 = vpop.trf.xlu0
    %v277 = vpop.trf.xlu0
    %v278 = vpop.trf.xlu0
    %v279 = vpop.trf.xlu0
    %v280 = vpop.trf.xlu0
    %v281 = vpop.trf.xlu0
    %v282 = vpop.trf.xlu0
    %v284 = vsel %vm116, %v267, 0
    %286 = vmatprep.subr.mxu0 0.0
    %287 = vmatpush1.msra.mxu0 0.0
    %288 = vmatprep.subr.mxu0 0.0
    %289 = vmatpush1.msra.mxu0 0.0
    %290 = vmatprep.subr.mxu0 0.0
    %291 = vmatpush1.msra.mxu0 0.0
    %292 = vmatprep.subr.mxu0 0.0
    %293 = vmatpush1.msra.mxu0 0.0
    %294 = vmatprep.subr.mxu0 0.0
    %295 = vmatpush1.msra.mxu0 0.0
    %296 = vmatprep.subr.mxu0 0.0
    %297 = vmatpush1.msra.mxu0 0.0
    %298 = vmatprep.subr.mxu0 0.0
    %299 = vmatpush1.msra.mxu0 0.0
    %300 = vmatprep.subr.mxu0 0.0
    %301 = vmatpush1.msra.mxu0 0.0
    %302 = vmatprep.subr.mxu0 0.0
    %303 = vmatpush1.msra.mxu0 0.0
    %304 = vmatprep.subr.mxu0 0.0
    %305 = vmatpush1.msra.mxu0 0.0
    %306 = vmatprep.subr.mxu0 0.0
    %307 = vmatpush1.msra.mxu0 0.0
    %308 = vmatprep.subr.mxu0 0.0
    %309 = vmatpush1.msra.mxu0 0.0
    %310 = vmatprep.subr.mxu0 0.0
    %311 = vmatpush1.msra.mxu0 0.0
    %312 = vmatprep.subr.mxu0 0.0
    %313 = vmatpush1.msra.mxu0 0.0
    %314 = vmatprep.subr.mxu0 0.0
    %315 = vmatpush1.msra.mxu0 %v130
    %316 = vmatprep.subr.mxu0 0.0
    %317 = vmatpush1.msra.mxu0 %v123
    %318 = vmatprep.subr.mxu0 0.0
    %319 = vmatpush2.msra.mxu0 0.0
    %320 = vmatprep.subr.mxu0 0.0
    %321 = vmatpush2.msra.mxu0 0.0
    %322 = vmatprep.subr.mxu0 0.0
    %323 = vmatpush2.msra.mxu0 0.0
    %324 = vmatprep.subr.mxu0 0.0
    %325 = vmatpush2.msra.mxu0 0.0
    %326 = vmatprep.subr.mxu0 0.0
    %327 = vmatpush2.msra.mxu0 0.0
    %328 = vmatprep.subr.mxu0 0.0
    %329 = vmatpush2.msra.mxu0 0.0
    %330 = vmatprep.subr.mxu0 0.0
    %331 = vmatpush2.msra.mxu0 0.0
    %332 = vmatprep.subr.mxu0 0.0
    %333 = vmatpush2.msra.mxu0 0.0
    %334 = vmatprep.subr.mxu0 0.0
    %335 = vmatpush2.msra.mxu0 0.0
    %336 = vmatprep.subr.mxu0 0.0
    %337 = vmatpush2.msra.mxu0 0.0
    %338 = vmatprep.subr.mxu0 0.0
    %339 = vmatpush2.msra.mxu0 0.0
    %340 = vmatprep.subr.mxu0 0.0
    %341 = vmatpush2.msra.mxu0 0.0
    %342 = vmatprep.subr.mxu0 0.0
    %343 = vmatpush2.msra.mxu0 0.0
    %344 = vmatprep.subr.mxu0 0.0
    %345 = vmatpush2.msra.mxu0 0.0
    %346 = vmatprep.subr.mxu0 0.0
    %347 = vmatpush2.msra.mxu0 0.0
    %348 = vmatprep.subr.mxu0 0.0
    %349 = vmatpush2.msra.mxu0 0.0
    %350 = vmatprep.mubr.f32.mxu0 0.0
    %351 = vmatmul.mubr.f32.gmra.mxu0 %v284
    %v352 = vpop.f32.mrf.mxu0
    %v353 = vadd.f32 0.0, %v352
    %v354 = vpop.f32.mrf.mxu0
    %355 = vdwg.mxu0
    %356 = vxpose.xlu0.b32.start [1/16] %v353, 128
    %357 = vxpose.xlu0.b32.cont [2/16] 0.0, 128
    %358 = vxpose.xlu0.b32.cont [3/16] 0.0, 128
    %359 = vxpose.xlu0.b32.cont [4/16] 0.0, 128
    %360 = vxpose.xlu0.b32.cont [5/16] 0.0, 128
    %361 = vxpose.xlu0.b32.cont [6/16] 0.0, 128
    %362 = vxpose.xlu0.b32.cont [7/16] 0.0, 128
    %363 = vxpose.xlu0.b32.cont [8/16] 0.0, 128
    %364 = vxpose.xlu0.b32.cont [9/16] 0.0, 128
    %365 = vxpose.xlu0.b32.cont [10/16] 0.0, 128
    %366 = vxpose.xlu0.b32.cont [11/16] 0.0, 128
    %367 = vxpose.xlu0.b32.cont [12/16] 0.0, 128
    %368 = vxpose.xlu0.b32.cont [13/16] 0.0, 128
    %369 = vxpose.xlu0.b32.cont [14/16] 0.0, 128
    %370 = vxpose.xlu0.b32.cont [15/16] 0.0, 128
    %371 = vxpose.xlu0.b32.end [16/16] 0.0, 128
    %v372 = vpop.trf.xlu0
    %v373 = vpop.trf.xlu0
    %v374 = vpop.trf.xlu0
    %v375 = vpop.trf.xlu0
    %v376 = vpop.trf.xlu0
    %v377 = vpop.trf.xlu0
    %v378 = vpop.trf.xlu0
    %v379 = vpop.trf.xlu0
    %v380 = vpop.trf.xlu0
    %v381 = vpop.trf.xlu0
    %v382 = vpop.trf.xlu0
    %v383 = vpop.trf.xlu0
    %v384 = vpop.trf.xlu0
    %v385 = vpop.trf.xlu0
    %v386 = vpop.trf.xlu0
    %v387 = vpop.trf.xlu0
    %vm392 = vcmask 1041409
    %v393 = vsel %vm392, %v190, %v181
    %vm394 = vcmask 1042434
    %v395 = vsel %vm394, %v199, %v393
    %vm396 = vcmask 1043459
    %v397 = vsel %vm396, %v208, %v395
    %vm398 = vcmask 31744
    %v400 = vsel %vm398, %v372, 0
    %v403 = vsel %vm398, %v373, 0
    %vm405 = vcmask 1043456
    %v406 = vsel %vm405, %v397, 0
    %408 = vmatprep.subr.mxu0 0.0
    %409 = vmatpush1.msra.mxu0 0.0
    %410 = vmatprep.subr.mxu0 0.0
    %411 = vmatpush1.msra.mxu0 0.0
    %412 = vmatprep.subr.mxu0 0.0
    %413 = vmatpush1.msra.mxu0 0.0
    %414 = vmatprep.subr.mxu0 0.0
    %415 = vmatpush1.msra.mxu0 0.0
    %416 = vmatprep.subr.mxu0 0.0
    %417 = vmatpush1.msra.mxu0 0.0
    %418 = vmatprep.subr.mxu0 0.0
    %419 = vmatpush1.msra.mxu0 0.0
    %420 = vmatprep.subr.mxu0 0.0
    %421 = vmatpush1.msra.mxu0 0.0
    %422 = vmatprep.subr.mxu0 0.0
    %423 = vmatpush1.msra.mxu0 0.0
    %424 = vmatprep.subr.mxu0 0.0
    %425 = vmatpush1.msra.mxu0 0.0
    %426 = vmatprep.subr.mxu0 0.0
    %427 = vmatpush1.msra.mxu0 0.0
    %428 = vmatprep.subr.mxu0 0.0
    %429 = vmatpush1.msra.mxu0 0.0
    %430 = vmatprep.subr.mxu0 0.0
    %431 = vmatpush1.msra.mxu0 0.0
    %432 = vmatprep.subr.mxu0 0.0
    %433 = vmatpush1.msra.mxu0 0.0
    %434 = vmatprep.subr.mxu0 0.0
    %435 = vmatpush1.msra.mxu0 0.0
    %436 = vmatprep.subr.mxu0 0.0
    %437 = vmatpush1.msra.mxu0 0.0
    %438 = vmatprep.subr.mxu0 0.0
    %439 = vmatpush1.msra.mxu0 %v406
    %440 = vmatprep.subr.mxu0 0.0
    %441 = vmatpush2.msra.mxu0 0.0
    %442 = vmatprep.subr.mxu0 0.0
    %443 = vmatpush2.msra.mxu0 0.0
    %444 = vmatprep.subr.mxu0 0.0
    %445 = vmatpush2.msra.mxu0 0.0
    %446 = vmatprep.subr.mxu0 0.0
    %447 = vmatpush2.msra.mxu0 0.0
    %448 = vmatprep.subr.mxu0 0.0
    %449 = vmatpush2.msra.mxu0 0.0
    %450 = vmatprep.subr.mxu0 0.0
    %451 = vmatpush2.msra.mxu0 0.0
    %452 = vmatprep.subr.mxu0 0.0
    %453 = vmatpush2.msra.mxu0 0.0
    %454 = vmatprep.subr.mxu0 0.0
    %455 = vmatpush2.msra.mxu0 0.0
    %456 = vmatprep.subr.mxu0 0.0
    %457 = vmatpush2.msra.mxu0 0.0
    %458 = vmatprep.subr.mxu0 0.0
    %459 = vmatpush2.msra.mxu0 0.0
    %460 = vmatprep.subr.mxu0 0.0
    %461 = vmatpush2.msra.mxu0 0.0
    %462 = vmatprep.subr.mxu0 0.0
    %463 = vmatpush2.msra.mxu0 0.0
    %464 = vmatprep.subr.mxu0 0.0
    %465 = vmatpush2.msra.mxu0 0.0
    %466 = vmatprep.subr.mxu0 0.0
    %467 = vmatpush2.msra.mxu0 0.0
    %468 = vmatprep.subr.mxu0 0.0
    %469 = vmatpush2.msra.mxu0 0.0
    %470 = vmatprep.subr.mxu0 0.0
    %471 = vmatpush2.msra.mxu0 0.0
    %472 = vmatprep.mubr.f32.mxu0 0.0
    %473 = vmatmul.mubr.f32.gmra.mxu0 %v400
    %v474 = vpop.f32.mrf.mxu0
    %v475 = vadd.f32 %v247, %v474
    %v476 = vpop.f32.mrf.mxu0
    %477 = vmatprep.mubr.f32.mxu0 0.0
    %478 = vmatmul.mubr.f32.gmra.mxu0 %v403
    %v479 = vpop.f32.mrf.mxu0
    %v480 = vadd.f32 %v248, %v479
    %v481 = vpop.f32.mrf.mxu0
    %482 = vdwg.mxu0
    %v483 = vxor.u32 %v475, 2147483648
    %v484 = vxor.u32 %v480, 2147483648
    %v485 = vmul.f32 %v483, 1.442695
    %v486 = vpow.pop %v485
    %v487 = vmul.f32 %v484, 1.442695
    %v488 = vpow.pop %v487
    %v489 = vadd.f32 %v486, 1.0
    %v490 = vadd.f32 %v488, 1.0
    %v491 = vrcp.pop %v489
    %v492 = vmul.f32 1.0, %v491
    %v493 = vrcp.pop %v490
    %v494 = vmul.f32 1.0, %v493
    %v496 = vsel %vm116, %v249, 0
    %v499 = vsel %vm116, %v250, 0
    %501 = vmatprep.subr.mxu0 0.0
    %502 = vmatpush1.msra.mxu0 0.0
    %503 = vmatprep.subr.mxu0 0.0
    %504 = vmatpush1.msra.mxu0 0.0
    %505 = vmatprep.subr.mxu0 0.0
    %506 = vmatpush1.msra.mxu0 0.0
    %507 = vmatprep.subr.mxu0 0.0
    %508 = vmatpush1.msra.mxu0 0.0
    %509 = vmatprep.subr.mxu0 0.0
    %510 = vmatpush1.msra.mxu0 0.0
    %511 = vmatprep.subr.mxu0 0.0
    %512 = vmatpush1.msra.mxu0 0.0
    %513 = vmatprep.subr.mxu0 0.0
    %514 = vmatpush1.msra.mxu0 0.0
    %515 = vmatprep.subr.mxu0 0.0
    %516 = vmatpush1.msra.mxu0 0.0
    %517 = vmatprep.subr.mxu0 0.0
    %518 = vmatpush1.msra.mxu0 0.0
    %519 = vmatprep.subr.mxu0 0.0
    %520 = vmatpush1.msra.mxu0 0.0
    %521 = vmatprep.subr.mxu0 0.0
    %522 = vmatpush1.msra.mxu0 0.0
    %523 = vmatprep.subr.mxu0 0.0
    %524 = vmatpush1.msra.mxu0 0.0
    %525 = vmatprep.subr.mxu0 0.0
    %526 = vmatpush1.msra.mxu0 0.0
    %527 = vmatprep.subr.mxu0 0.0
    %528 = vmatpush1.msra.mxu0 0.0
    %529 = vmatprep.subr.mxu0 0.0
    %530 = vmatpush1.msra.mxu0 %v494
    %531 = vmatprep.subr.mxu0 0.0
    %532 = vmatpush1.msra.mxu0 %v492
    %533 = vmatprep.subr.mxu0 0.0
    %534 = vmatpush2.msra.mxu0 0.0
    %535 = vmatprep.subr.mxu0 0.0
    %536 = vmatpush2.msra.mxu0 0.0
    %537 = vmatprep.subr.mxu0 0.0
    %538 = vmatpush2.msra.mxu0 0.0
    %539 = vmatprep.subr.mxu0 0.0
    %540 = vmatpush2.msra.mxu0 0.0
    %541 = vmatprep.subr.mxu0 0.0
    %542 = vmatpush2.msra.mxu0 0.0
    %543 = vmatprep.subr.mxu0 0.0
    %544 = vmatpush2.msra.mxu0 0.0
    %545 = vmatprep.subr.mxu0 0.0
    %546 = vmatpush2.msra.mxu0 0.0
    %547 = vmatprep.subr.mxu0 0.0
    %548 = vmatpush2.msra.mxu0 0.0
    %549 = vmatprep.subr.mxu0 0.0
    %550 = vmatpush2.msra.mxu0 0.0
    %551 = vmatprep.subr.mxu0 0.0
    %552 = vmatpush2.msra.mxu0 0.0
    %553 = vmatprep.subr.mxu0 0.0
    %554 = vmatpush2.msra.mxu0 0.0
    %555 = vmatprep.subr.mxu0 0.0
    %556 = vmatpush2.msra.mxu0 0.0
    %557 = vmatprep.subr.mxu0 0.0
    %558 = vmatpush2.msra.mxu0 0.0
    %559 = vmatprep.subr.mxu0 0.0
    %560 = vmatpush2.msra.mxu0 0.0
    %561 = vmatprep.subr.mxu0 0.0
    %562 = vmatpush2.msra.mxu0 0.0
    %563 = vmatprep.subr.mxu0 0.0
    %564 = vmatpush2.msra.mxu0 0.0
    %565 = vmatprep.mubr.f32.mxu0 0.0
    %566 = vmatmul.mubr.f32.gmra.mxu0 %v496
    %v567 = vpop.f32.mrf.mxu0
    %v568 = vadd.f32 0.0, %v567
    %v569 = vpop.f32.mrf.mxu0
    %570 = vmatprep.mubr.f32.mxu0 0.0
    %571 = vmatmul.mubr.f32.gmra.mxu0 %v499
    %v572 = vpop.f32.mrf.mxu0
    %v573 = vadd.f32 0.0, %v572
    %v574 = vpop.f32.mrf.mxu0
    %575 = vdwg.mxu0
    %576 = vmatprep.subr.mxu0 0.0
    %577 = vmatpush1.msra.mxu0 0.0
    %578 = vmatprep.subr.mxu0 0.0
    %579 = vmatpush1.msra.mxu0 0.0
    %580 = vmatprep.subr.mxu0 0.0
    %581 = vmatpush1.msra.mxu0 0.0
    %582 = vmatprep.subr.mxu0 0.0
    %583 = vmatpush1.msra.mxu0 0.0
    %584 = vmatprep.subr.mxu0 0.0
    %585 = vmatpush1.msra.mxu0 0.0
    %586 = vmatprep.subr.mxu0 0.0
    %587 = vmatpush1.msra.mxu0 0.0
    %588 = vmatprep.subr.mxu0 0.0
    %589 = vmatpush1.msra.mxu0 0.0
    %590 = vmatprep.subr.mxu0 0.0
    %591 = vmatpush1.msra.mxu0 0.0
    %592 = vmatprep.subr.mxu0 0.0
    %593 = vmatpush1.msra.mxu0 0.0
    %594 = vmatprep.subr.mxu0 0.0
    %595 = vmatpush1.msra.mxu0 0.0
    %596 = vmatprep.subr.mxu0 0.0
    %597 = vmatpush1.msra.mxu0 0.0
    %598 = vmatprep.subr.mxu0 0.0
    %599 = vmatpush1.msra.mxu0 0.0
    %600 = vmatprep.subr.mxu0 0.0
    %601 = vmatpush1.msra.mxu0 0.0
    %602 = vmatprep.subr.mxu0 0.0
    %603 = vmatpush1.msra.mxu0 0.0
    %604 = vmatprep.subr.mxu0 0.0
    %605 = vmatpush1.msra.mxu0 %v144
    %606 = vmatprep.subr.mxu0 0.0
    %607 = vmatpush1.msra.mxu0 %v137
    %608 = vmatprep.subr.mxu0 0.0
    %609 = vmatpush2.msra.mxu0 0.0
    %610 = vmatprep.subr.mxu0 0.0
    %611 = vmatpush2.msra.mxu0 0.0
    %612 = vmatprep.subr.mxu0 0.0
    %613 = vmatpush2.msra.mxu0 0.0
    %614 = vmatprep.subr.mxu0 0.0
    %615 = vmatpush2.msra.mxu0 0.0
    %616 = vmatprep.subr.mxu0 0.0
    %617 = vmatpush2.msra.mxu0 0.0
    %618 = vmatprep.subr.mxu0 0.0
    %619 = vmatpush2.msra.mxu0 0.0
    %620 = vmatprep.subr.mxu0 0.0
    %621 = vmatpush2.msra.mxu0 0.0
    %622 = vmatprep.subr.mxu0 0.0
    %623 = vmatpush2.msra.mxu0 0.0
    %624 = vmatprep.subr.mxu0 0.0
    %625 = vmatpush2.msra.mxu0 0.0
    %626 = vmatprep.subr.mxu0 0.0
    %627 = vmatpush2.msra.mxu0 0.0
    %628 = vmatprep.subr.mxu0 0.0
    %629 = vmatpush2.msra.mxu0 0.0
    %630 = vmatprep.subr.mxu0 0.0
    %631 = vmatpush2.msra.mxu0 0.0
    %632 = vmatprep.subr.mxu0 0.0
    %633 = vmatpush2.msra.mxu0 0.0
    %634 = vmatprep.subr.mxu0 0.0
    %635 = vmatpush2.msra.mxu0 0.0
    %636 = vmatprep.subr.mxu0 0.0
    %637 = vmatpush2.msra.mxu0 0.0
    %638 = vmatprep.subr.mxu0 0.0
    %639 = vmatpush2.msra.mxu0 0.0
    %640 = vmatprep.mubr.f32.mxu0 0.0
    %641 = vmatmul.mubr.f32.gmra.mxu0 %v284
    %v642 = vpop.f32.mrf.mxu0
    %v643 = vadd.f32 0.0, %v642
    %v644 = vpop.f32.mrf.mxu0
    %645 = vdwg.mxu0
    %646 = vxpose.xlu0.b32.start [1/16] %v643, 128
    %647 = vxpose.xlu0.b32.cont [2/16] 0.0, 128
    %648 = vxpose.xlu0.b32.cont [3/16] 0.0, 128
    %649 = vxpose.xlu0.b32.cont [4/16] 0.0, 128
    %650 = vxpose.xlu0.b32.cont [5/16] 0.0, 128
    %651 = vxpose.xlu0.b32.cont [6/16] 0.0, 128
    %652 = vxpose.xlu0.b32.cont [7/16] 0.0, 128
    %653 = vxpose.xlu0.b32.cont [8/16] 0.0, 128
    %654 = vxpose.xlu0.b32.cont [9/16] 0.0, 128
    %655 = vxpose.xlu0.b32.cont [10/16] 0.0, 128
    %656 = vxpose.xlu0.b32.cont [11/16] 0.0, 128
    %657 = vxpose.xlu0.b32.cont [12/16] 0.0, 128
    %658 = vxpose.xlu0.b32.cont [13/16] 0.0, 128
    %659 = vxpose.xlu0.b32.cont [14/16] 0.0, 128
    %660 = vxpose.xlu0.b32.cont [15/16] 0.0, 128
    %661 = vxpose.xlu0.b32.end [16/16] 0.0, 128
    %v662 = vpop.trf.xlu0
    %v663 = vpop.trf.xlu0
    %v664 = vpop.trf.xlu0
    %v665 = vpop.trf.xlu0
    %v666 = vpop.trf.xlu0
    %v667 = vpop.trf.xlu0
    %v668 = vpop.trf.xlu0
    %v669 = vpop.trf.xlu0
    %v670 = vpop.trf.xlu0
    %v671 = vpop.trf.xlu0
    %v672 = vpop.trf.xlu0
    %v673 = vpop.trf.xlu0
    %v674 = vpop.trf.xlu0
    %v675 = vpop.trf.xlu0
    %v676 = vpop.trf.xlu0
    %v677 = vpop.trf.xlu0
    %v682 = vsel %vm392, %v226, %v217
    %v683 = vsel %vm394, %v235, %v682
    %v684 = vsel %vm396, %v244, %v683
    %v686 = vsel %vm398, %v662, 0
    %v689 = vsel %vm398, %v663, 0
    %v691 = vsel %vm405, %v684, 0
    %693 = vmatprep.subr.mxu0 0.0
    %694 = vmatpush1.msra.mxu0 0.0
    %695 = vmatprep.subr.mxu0 0.0
    %696 = vmatpush1.msra.mxu0 0.0
    %697 = vmatprep.subr.mxu0 0.0
    %698 = vmatpush1.msra.mxu0 0.0
    %699 = vmatprep.subr.mxu0 0.0
    %700 = vmatpush1.msra.mxu0 0.0
    %701 = vmatprep.subr.mxu0 0.0
    %702 = vmatpush1.msra.mxu0 0.0
    %703 = vmatprep.subr.mxu0 0.0
    %704 = vmatpush1.msra.mxu0 0.0
    %705 = vmatprep.subr.mxu0 0.0
    %706 = vmatpush1.msra.mxu0 0.0
    %707 = vmatprep.subr.mxu0 0.0
    %708 = vmatpush1.msra.mxu0 0.0
    %709 = vmatprep.subr.mxu0 0.0
    %710 = vmatpush1.msra.mxu0 0.0
    %711 = vmatprep.subr.mxu0 0.0
    %712 = vmatpush1.msra.mxu0 0.0
    %713 = vmatprep.subr.mxu0 0.0
    %714 = vmatpush1.msra.mxu0 0.0
    %715 = vmatprep.subr.mxu0 0.0
    %716 = vmatpush1.msra.mxu0 0.0
    %717 = vmatprep.subr.mxu0 0.0
    %718 = vmatpush1.msra.mxu0 0.0
    %719 = vmatprep.subr.mxu0 0.0
    %720 = vmatpush1.msra.mxu0 0.0
    %721 = vmatprep.subr.mxu0 0.0
    %722 = vmatpush1.msra.mxu0 0.0
    %723 = vmatprep.subr.mxu0 0.0
    %724 = vmatpush1.msra.mxu0 %v691
    %725 = vmatprep.subr.mxu0 0.0
    %726 = vmatpush2.msra.mxu0 0.0
    %727 = vmatprep.subr.mxu0 0.0
    %728 = vmatpush2.msra.mxu0 0.0
    %729 = vmatprep.subr.mxu0 0.0
    %730 = vmatpush2.msra.mxu0 0.0
    %731 = vmatprep.subr.mxu0 0.0
    %732 = vmatpush2.msra.mxu0 0.0
    %733 = vmatprep.subr.mxu0 0.0
    %734 = vmatpush2.msra.mxu0 0.0
    %735 = vmatprep.subr.mxu0 0.0
    %736 = vmatpush2.msra.mxu0 0.0
    %737 = vmatprep.subr.mxu0 0.0
    %738 = vmatpush2.msra.mxu0 0.0
    %739 = vmatprep.subr.mxu0 0.0
    %740 = vmatpush2.msra.mxu0 0.0
    %741 = vmatprep.subr.mxu0 0.0
    %742 = vmatpush2.msra.mxu0 0.0
    %743 = vmatprep.subr.mxu0 0.0
    %744 = vmatpush2.msra.mxu0 0.0
    %745 = vmatprep.subr.mxu0 0.0
    %746 = vmatpush2.msra.mxu0 0.0
    %747 = vmatprep.subr.mxu0 0.0
    %748 = vmatpush2.msra.mxu0 0.0
    %749 = vmatprep.subr.mxu0 0.0
    %750 = vmatpush2.msra.mxu0 0.0
    %751 = vmatprep.subr.mxu0 0.0
    %752 = vmatpush2.msra.mxu0 0.0
    %753 = vmatprep.subr.mxu0 0.0
    %754 = vmatpush2.msra.mxu0 0.0
    %755 = vmatprep.subr.mxu0 0.0
    %756 = vmatpush2.msra.mxu0 0.0
    %757 = vmatprep.mubr.f32.mxu0 0.0
    %758 = vmatmul.mubr.f32.gmra.mxu0 %v686
    %v759 = vpop.f32.mrf.mxu0
    %v760 = vadd.f32 %v247, %v759
    %v761 = vpop.f32.mrf.mxu0
    %762 = vmatprep.mubr.f32.mxu0 0.0
    %763 = vmatmul.mubr.f32.gmra.mxu0 %v689
    %v764 = vpop.f32.mrf.mxu0
    %v765 = vadd.f32 %v248, %v764
    %v766 = vpop.f32.mrf.mxu0
    %767 = vdwg.mxu0
    %v768 = vxor.u32 %v760, 2147483648
    %v769 = vxor.u32 %v765, 2147483648
    %v770 = vmul.f32 %v768, 1.442695
    %v771 = vpow.pop %v770
    %v772 = vmul.f32 %v769, 1.442695
    %v773 = vpow.pop %v772
    %v774 = vadd.f32 %v771, 1.0
    %v775 = vadd.f32 %v773, 1.0
    %v776 = vrcp.pop %v774
    %v777 = vmul.f32 1.0, %v776
    %v778 = vrcp.pop %v775
    %v779 = vmul.f32 1.0, %v778
    %780 = vmatprep.subr.mxu0 0.0
    %781 = vmatpush1.msra.mxu0 0.0
    %782 = vmatprep.subr.mxu0 0.0
    %783 = vmatpush1.msra.mxu0 0.0
    %784 = vmatprep.subr.mxu0 0.0
    %785 = vmatpush1.msra.mxu0 0.0
    %786 = vmatprep.subr.mxu0 0.0
    %787 = vmatpush1.msra.mxu0 0.0
    %788 = vmatprep.subr.mxu0 0.0
    %789 = vmatpush1.msra.mxu0 0.0
    %790 = vmatprep.subr.mxu0 0.0
    %791 = vmatpush1.msra.mxu0 0.0
    %792 = vmatprep.subr.mxu0 0.0
    %793 = vmatpush1.msra.mxu0 0.0
    %794 = vmatprep.subr.mxu0 0.0
    %795 = vmatpush1.msra.mxu0 0.0
    %796 = vmatprep.subr.mxu0 0.0
    %797 = vmatpush1.msra.mxu0 0.0
    %798 = vmatprep.subr.mxu0 0.0
    %799 = vmatpush1.msra.mxu0 0.0
    %800 = vmatprep.subr.mxu0 0.0
    %801 = vmatpush1.msra.mxu0 0.0
    %802 = vmatprep.subr.mxu0 0.0
    %803 = vmatpush1.msra.mxu0 0.0
    %804 = vmatprep.subr.mxu0 0.0
    %805 = vmatpush1.msra.mxu0 0.0
    %806 = vmatprep.subr.mxu0 0.0
    %807 = vmatpush1.msra.mxu0 0.0
    %808 = vmatprep.subr.mxu0 0.0
    %809 = vmatpush1.msra.mxu0 %v779
    %810 = vmatprep.subr.mxu0 0.0
    %811 = vmatpush1.msra.mxu0 %v777
    %812 = vmatprep.subr.mxu0 0.0
    %813 = vmatpush2.msra.mxu0 0.0
    %814 = vmatprep.subr.mxu0 0.0
    %815 = vmatpush2.msra.mxu0 0.0
    %816 = vmatprep.subr.mxu0 0.0
    %817 = vmatpush2.msra.mxu0 0.0
    %818 = vmatprep.subr.mxu0 0.0
    %819 = vmatpush2.msra.mxu0 0.0
    %820 = vmatprep.subr.mxu0 0.0
    %821 = vmatpush2.msra.mxu0 0.0
    %822 = vmatprep.subr.mxu0 0.0
    %823 = vmatpush2.msra.mxu0 0.0
    %824 = vmatprep.subr.mxu0 0.0
    %825 = vmatpush2.msra.mxu0 0.0
    %826 = vmatprep.subr.mxu0 0.0
    %827 = vmatpush2.msra.mxu0 0.0
    %828 = vmatprep.subr.mxu0 0.0
    %829 = vmatpush2.msra.mxu0 0.0
    %830 = vmatprep.subr.mxu0 0.0
    %831 = vmatpush2.msra.mxu0 0.0
    %832 = vmatprep.subr.mxu0 0.0
    %833 = vmatpush2.msra.mxu0 0.0
    %834 = vmatprep.subr.mxu0 0.0
    %835 = vmatpush2.msra.mxu0 0.0
    %836 = vmatprep.subr.mxu0 0.0
    %837 = vmatpush2.msra.mxu0 0.0
    %838 = vmatprep.subr.mxu0 0.0
    %839 = vmatpush2.msra.mxu0 0.0
    %840 = vmatprep.subr.mxu0 0.0
    %841 = vmatpush2.msra.mxu0 0.0
    %842 = vmatprep.subr.mxu0 0.0
    %843 = vmatpush2.msra.mxu0 0.0
    %844 = vmatprep.mubr.f32.mxu0 0.0
    %845 = vmatmul.mubr.f32.gmra.mxu0 %v496
    %v846 = vpop.f32.mrf.mxu0
    %v847 = vadd.f32 0.0, %v846
    %v848 = vpop.f32.mrf.mxu0
    %849 = vmatprep.mubr.f32.mxu0 0.0
    %850 = vmatmul.mubr.f32.gmra.mxu0 %v499
    %v851 = vpop.f32.mrf.mxu0
    %v852 = vadd.f32 0.0, %v851
    %v853 = vpop.f32.mrf.mxu0
    %854 = vdwg.mxu0
    %v855 = vsel %vm116, %v568, 0.0
    %v856 = vsel %vm116, %v573, 0.0
    %v857 = vadd.f32 %v855, %v856
    %v858 = vrot.slane %v857, 4
    %v859 = vadd.f32 %v857, %v858
    %v860 = vrot.slane %v859, 2
    %v861 = vadd.f32 %v859, %v860
    %v862 = vrot.slane %v861, 1
    %v863 = vadd.f32 %v861, %v862
    %v864 = vsel %vm116, %v847, 0.0
    %v865 = vsel %vm116, %v852, 0.0
    %v866 = vadd.f32 %v864, %v865
    %v867 = vrot.slane %v866, 4
    %v868 = vadd.f32 %v866, %v867
    %v869 = vrot.slane %v868, 2
    %v870 = vadd.f32 %v868, %v869
    %v871 = vrot.slane %v870, 1
    %v872 = vadd.f32 %v870, %v871
    %v873 = vadd.f32 %v863, %v872
    %v874 = vmul.f32 %v873, 0.03125
    %v875 = vsub.f32 %v568, %v874
    %v876 = vsub.f32 %v573, %v874
    %v877 = vmul.f32 %v875, %v875
    %v878 = vmul.f32 %v876, %v876
    %v879 = vsel %vm116, %v877, 0.0
    %v880 = vsel %vm116, %v878, 0.0
    %v881 = vadd.f32 %v879, %v880
    %v882 = vrot.slane %v881, 4
    %v883 = vadd.f32 %v881, %v882
    %v884 = vrot.slane %v883, 2
    %v885 = vadd.f32 %v883, %v884
    %v886 = vrot.slane %v885, 1
    %v887 = vadd.f32 %v885, %v886
    %v888 = vsub.f32 %v847, %v874
    %v889 = vsub.f32 %v852, %v874
    %v890 = vmul.f32 %v888, %v888
    %v891 = vmul.f32 %v889, %v889
    %v892 = vsel %vm116, %v890, 0.0
    %v893 = vsel %vm116, %v891, 0.0
    %v894 = vadd.f32 %v892, %v893
    %v895 = vrot.slane %v894, 4
    %v896 = vadd.f32 %v894, %v895
    %v897 = vrot.slane %v896, 2
    %v898 = vadd.f32 %v896, %v897
    %v899 = vrot.slane %v898, 1
    %v900 = vadd.f32 %v898, %v899
    %v901 = vadd.f32 %v887, %v900
    %v902 = vmul.f32 %v901, 0.03125
    %v903 = vadd.f32 %v902, 1e-05
    %v904 = vrsqrt.pop %v903
    %v905 = vld [vmem:[%s6] sm:$0x1]
    %v906 = vmul.f32 %v904, %v905
    %v907 = vld [vmem:[%s7] sm:$0x1]
    %v908 = vmul.f32 %v874, %v906
    %v909 = vsub.f32 %v907, %v908
    %v910 = vlaneseq
    %v911 = vshrl.u32 %v910, 7
    %v912 = vsub.s32 0, %v911
    %v913 = vrot.slane %v906, %v912
    %v914 = vmul.f32 %v568, %v913
    %v915 = vmul.f32 %v573, %v913
    %v917 = vlaneseq
    %v918 = vshrl.u32 %v917, 7
    %v919 = vsub.s32 0, %v918
    %v920 = vrot.slane %v909, %v919
    %v922 = vadd.f32 %v914, %v920
    %v923 = vadd.f32 %v915, %v920
    %v924 = vsel %vm116, %v922, -inf
    %925 = vmax.xlane.f32.xlu0 %v924
    %v926 = vpop.xlane.xlu0 %925
    %v927 = vsel %vm116, %v923, -inf
    %928 = vmax.xlane.f32.xlu0 %v927
    %v929 = vpop.xlane.xlu0 %928
    %v930 = vsub.f32 %v922, %v926
    %v931 = vsub.f32 %v923, %v929
    %v932 = vmul.f32 %v930, 1.442695
    %v933 = vpow.pop %v932
    %v934 = vmul.f32 %v931, 1.442695
    %v935 = vpow.pop %v934
    %v936 = vsel %vm116, %v933, 0.0
    %937 = vadd.xlane.f32.xlu0 %v936
    %v938 = vpop.xlane.xlu0 %937
    %v939 = vsel %vm116, %v935, 0.0
    %940 = vadd.xlane.f32.xlu0 %v939
    %v941 = vpop.xlane.xlu0 %940
    %v942 = vrcp.pop %v938
    %v943 = vmul.f32 %v933, %v942
    %v944 = vrcp.pop %v941
    %v945 = vmul.f32 %v935, %v944
    %946 = vst.msk [vmem:[#allocation5] sm:$0xff] %vm116, %v943
    %947 = vst.msk [vmem:[#allocation5 + $0x8] sm:$0xff] %vm116, %v945
    %v948 = vmul.f32 %v847, %v913
    %v949 = vmul.f32 %v852, %v913
    %v950 = vadd.f32 %v948, %v920
    %v951 = vadd.f32 %v949, %v920
    %v952 = vsel %vm116, %v950, -inf
    %953 = vmax.xlane.f32.xlu0 %v952
    %v954 = vpop.xlane.xlu0 %953
    %v955 = vsel %vm116, %v951, -inf
    %956 = vmax.xlane.f32.xlu0 %v955
    %v957 = vpop.xlane.xlu0 %956
    %v958 = vsub.f32 %v950, %v954
    %v959 = vsub.f32 %v951, %v957
    %v960 = vmul.f32 %v958, 1.442695
    %v961 = vpow.pop %v960
    %v962 = vmul.f32 %v959, 1.442695
    %v963 = vpow.pop %v962
    %v964 = vsel %vm116, %v961, 0.0
    %965 = vadd.xlane.f32.xlu0 %v964
    %v966 = vpop.xlane.xlu0 %965
    %v967 = vsel %vm116, %v963, 0.0
    %968 = vadd.xlane.f32.xlu0 %v967
    %v969 = vpop.xlane.xlu0 %968
    %v970 = vrcp.pop %v966
    %v971 = vmul.f32 %v961, %v970
    %v972 = vrcp.pop %v969
    %v973 = vmul.f32 %v963, %v972
    %s974 = scalar_lea.vmem [#allocation5], 16
    %975 = vst.msk [vmem:[%s974] sm:$0xff] %vm116, %v971
    %976 = vst.msk [vmem:[%s974 + $0x8] sm:$0xff] %vm116, %v973
    // Predicated region
    $region38: #{tatt_1_r_forward.1} parent=1 // pred_check
      _
    $region39: #{tatt_1_r_forward.1} parent=1 // pred_check_branch
      %978 = sbr.rel (0) target = $region41
    $region40: #{tatt_1_r_forward.1} parent=1 // pred_region
      %s980 = ssub.s32 512, 512
      %981 = vsyncadd [#allocation4], %s980
      %s982 = sshll.u32 [#allocation5], 4
      %s983 = int_to_ptr.vmem [resolvable:$true] %s982
      %988 = dma.vmem_to_hbm [thread:$0]  %s983, 512, %s8, [#allocation4], 128, 128, 8
    $region41: #{tatt_1_r_forward.1} parent=1 // pred_fallthru
      _
    // Predicated region
    $region42: #{tatt_1_r_forward.1} parent=1 // pred_check
      _
    $region43: #{tatt_1_r_forward.1} parent=1 // pred_check_branch
      %990 = sbr.rel (0) target = $region45
    $region44: #{tatt_1_r_forward.1} parent=1 // pred_region
      %991 = dma.done [#allocation4], 512
    $region45: #{tatt_1_r_forward.1} parent=1 // pred_fallthru
      _
    %992 = vsyncpa [#allocation3], 1
    %993 = vsyncpa [#allocation4], 1

</llo_original>
